<compile_context>
chip_gen: v7x
topology: tpu7x:2x2x1
jax: 0.10.0
libtpu: 0.0.40
codegen_flags: <defaults>
</compile_context>

<pallas_src>
import functools

import jax
import jax.numpy as jnp
from jax.experimental import pallas as pl
from jax.experimental.pallas import tpu as pltpu


def _se_kernel(x_ref, w1t_ref, b1_ref, w2t_ref, b2_ref, o_ref, *,
               channels_last, use_mxu, inv_hw):
    x = x_ref[...]                                   # (Nb, HW, C) or (Nb, C, HW)

    # Global average pool (AdaptiveAvgPool2d(1)); accumulate in f32 without
    # materializing an f32 copy of the whole tile.
    spatial_axis = 1 if channels_last else 2
    pooled = jnp.sum(x, axis=spatial_axis, dtype=jnp.float32) * inv_hw   # (Nb, C)

    w1t = w1t_ref[...]                               # (C, Cr) f32 (BN1 folded)
    w2t = w2t_ref[...]                               # (Cr, C) f32 (BN2 folded)

    # FC1 (1x1 conv C -> C/r) + ReLU.
    if use_mxu:
        h = jnp.dot(pooled, w1t, preferred_element_type=jnp.float32)     # (Nb, Cr)
    else:
        # VPU broadcast-multiply + sublane reduce (avoids narrow MXU matvec).
        h = jnp.sum(pooled[:, :, None] * w1t[None, :, :], axis=1)        # (Nb, Cr)
    h = jnp.maximum(h + b1_ref[...], 0.0)

    # FC2 (1x1 conv C/r -> C) + hsigmoid = relu6(x + 3) / 6.
    if use_mxu:
        s = jnp.dot(h, w2t, preferred_element_type=jnp.float32)          # (Nb, C)
    else:
        s = jnp.sum(h[:, :, None] * w2t[None, :, :], axis=1)             # (Nb, C)
    s = jnp.clip(s + b2_ref[...] + 3.0, 0.0, 6.0) * (1.0 / 6.0)

    # Broadcast multiply over spatial, in the native input dtype.
    s = s.astype(x.dtype)
    if channels_last:
        o_ref[...] = x * s[:, None, :]
    else:
        o_ref[...] = x * s[:, :, None]


def _lane_util(d):
    """Fraction of the last-dim 128-lane vregs actually used."""
    return d / (pl.cdiv(d, 128) * 128)


def _choose_nb(n, sample_bytes, target_bytes=1 << 20, cap_bytes=4 << 20):
    """Largest divisor of n with tile <= target (HBM-roofline sweet spot),
    keeping >= 2 grid steps so both v7x TensorCores stay busy. Total resident
    VMEM (~4x the tile with double buffering) stays far below the 16/32 MiB
    scoped defaults, so no vmem_limit_bytes override is needed."""
    nb = 1
    for cand in range(1, n + 1):
        if n % cand != 0:
            continue
        if n >= 2 and (n // cand) < 2:
            continue
        if cand * sample_bytes <= min(target_bytes, cap_bytes):
            nb = cand
    return nb


def se_module(x, w1, b1, w2, b2, *, nb=None):
    """x: (N, C, H, W). w1: (Cr, C), b1: (Cr,), w2: (C, Cr), b2: (C,) —
    BN-folded 1x1 conv weights/biases (float32)."""
    N, C, H, W = x.shape
    Cr = w1.shape[0]
    HW = H * W

    # Lane-dense output layout: put the denser axis on the lane (last) dim.
    channels_last = _lane_util(C) > _lane_util(HW)
    if channels_last:
        x3 = x.transpose(0, 2, 3, 1).reshape(N, HW, C)      # (N, HW, C)
    else:
        x3 = x.reshape(N, C, HW)                            # (N, C, HW)

    sample_bytes = C * HW * x.dtype.itemsize
    if nb is None:
        nb = _choose_nb(N, sample_bytes)
    blk_shape = (nb, HW, C) if channels_last else (nb, C, HW)

    # Only drive the MXU when both channel dims give decent column utilization.
    use_mxu = (Cr >= 128) and (C >= 128)

    # Weights pre-transposed (no in-kernel transpose); biases lane-major rows.
    w1t = w1.T.astype(jnp.float32)                          # (C, Cr)
    w2t = w2.T.astype(jnp.float32)                          # (Cr, C)
    b1r = jnp.asarray(b1, jnp.float32).reshape(1, Cr)
    b2r = jnp.asarray(b2, jnp.float32).reshape(1, C)

    kernel = functools.partial(
        _se_kernel,
        channels_last=channels_last,
        use_mxu=use_mxu,
        inv_hw=float(1.0 / HW),
    )

    out3 = pl.pallas_call(
        kernel,
        out_shape=jax.ShapeDtypeStruct(x3.shape, x.dtype),
        grid_spec=pltpu.PrefetchScalarGridSpec(
            num_scalar_prefetch=0,
            grid=(N // nb,),
            in_specs=[
                pl.BlockSpec(blk_shape, lambda n: (n, 0, 0)),
                pl.BlockSpec((C, Cr), lambda n: (0, 0)),
                pl.BlockSpec((1, Cr), lambda n: (0, 0)),
                pl.BlockSpec((Cr, C), lambda n: (0, 0)),
                pl.BlockSpec((1, C), lambda n: (0, 0)),
            ],
            out_specs=pl.BlockSpec(blk_shape, lambda n: (n, 0, 0)),
        ),
        compiler_params=pltpu.CompilerParams(
            dimension_semantics=("parallel",)),
    )(x3, w1t, b1r, w2t, b2r)

    if channels_last:
        return out3.reshape(N, H, W, C).transpose(0, 3, 1, 2)
    return out3.reshape(N, C, H, W)


def fold_bn(conv_w, gamma, beta, mean, var, eps=1e-5):
    """Fold eval-mode BatchNorm into a bias-free 1x1 conv -> (w_folded, bias)."""
    scale = gamma / jnp.sqrt(var + eps)                     # (Cout,)
    w_f = conv_w * scale[:, None]                           # (Cout, Cin)
    b_f = beta - mean * scale                               # (Cout,)
    return w_f.astype(jnp.float32), b_f.astype(jnp.float32)


def reference(x, w1, b1, w2, b2):
    pooled = jnp.mean(x, axis=(2, 3))                       # (N, C)
    h = jnp.maximum(pooled @ w1.T + b1, 0.0)                # (N, Cr)
    s = jnp.clip(h @ w2.T + b2 + 3.0, 0.0, 6.0) / 6.0       # hsigmoid
    return x * s[:, :, None, None]


def _make_case(key, N, C, H, W, reduction=4):
    Cr = C // reduction
    kx, k1, k2, kg1, kg2 = jax.random.split(key, 5)
    x = jax.random.normal(kx, (N, C, H, W), dtype=jnp.float32)
    conv1_w = jax.random.normal(k1, (Cr, C), dtype=jnp.float32) * 0.2
    conv2_w = jax.random.normal(k2, (C, Cr), dtype=jnp.float32) * 0.2
    bn1_gamma = 1.0 + 0.1 * jax.random.normal(kg1, (Cr,), dtype=jnp.float32)
    bn2_gamma = 1.0 + 0.1 * jax.random.normal(kg2, (C,), dtype=jnp.float32)
    zeros_r, ones_r = jnp.zeros((Cr,), jnp.float32), jnp.ones((Cr,), jnp.float32)
    zeros_c, ones_c = jnp.zeros((C,), jnp.float32), jnp.ones((C,), jnp.float32)
    w1, b1 = fold_bn(conv1_w, bn1_gamma, zeros_r, zeros_r, ones_r)
    w2, b2 = fold_bn(conv2_w, bn2_gamma, zeros_c, zeros_c, ones_c)
    return x, w1, b1, w2, b2


if __name__ == "__main__":
    key = jax.random.PRNGKey(0)
    k_a, k_b = jax.random.split(key, 2)

    # Case A: large spatial (HW=256 multiple of 128) -> channels-first layout.
    xA, w1A, b1A, w2A, b2A = _make_case(k_a, N=2, C=8, H=16, W=16)
    outA = se_module(xA, w1A, b1A, w2A, b2A)
    jax.block_until_ready(outA)
    refA = reference(xA, w1A, b1A, w2A, b2A)
    assert jnp.allclose(outA, refA, atol=1e-5, rtol=1e-5), "mismatch (case A)"

    # Case B: small spatial (7x7), wide channels -> channels-last (lane-dense).
    xB, w1B, b1B, w2B, b2B = _make_case(k_b, N=2, C=128, H=7, W=7)
    outB = se_module(xB, w1B, b1B, w2B, b2B)
    jax.block_until_ready(outB)
    refB = reference(xB, w1B, b1B, w2B, b2B)
    assert jnp.allclose(outB, refB, atol=1e-5, rtol=1e-5), "mismatch (case B)"

    print("KERNEL_OK")
</pallas_src>

<mosaic_0001>
module attributes {stable_mosaic.version = 11 : i64} {
  func.func @_se_kernel(%arg0: i32, %arg1: memref<1x8x256xf32, #tpu.memory_space<vmem>>, %arg2: memref<8x2xf32, #tpu.memory_space<vmem>>, %arg3: memref<1x2xf32, #tpu.memory_space<vmem>>, %arg4: memref<2x8xf32, #tpu.memory_space<vmem>>, %arg5: memref<1x8xf32, #tpu.memory_space<vmem>>, %arg6: memref<1x8x256xf32, #tpu.memory_space<vmem>>) attributes {dimension_semantics = [#tpu.dimension_semantics<parallel>], iteration_bounds = array<i64: 2>, scalar_prefetch = 0 : i64, scratch_operands = 0 : i64, tpu.core_type = #tpu.core_type<tc>, window_params = [{transform_indices = @transform_0, window_bounds = array<i64: 1, 8, 256>}, {pipeline_mode = #tpu.pipeline_mode<synchronous>, transform_indices = @transform_1, window_bounds = array<i64: 8, 2>}, {pipeline_mode = #tpu.pipeline_mode<synchronous>, transform_indices = @transform_2, window_bounds = array<i64: 1, 2>}, {pipeline_mode = #tpu.pipeline_mode<synchronous>, transform_indices = @transform_3, window_bounds = array<i64: 2, 8>}, {pipeline_mode = #tpu.pipeline_mode<synchronous>, transform_indices = @transform_4, window_bounds = array<i64: 1, 8>}, {transform_indices = @transform_5, window_bounds = array<i64: 1, 8, 256>}]} {
    %c0 = arith.constant 0 : index
    %c0_0 = arith.constant 0 : index
    %c0_1 = arith.constant 0 : index
    %0 = vector.load %arg1[%c0, %c0_0, %c0_1] : memref<1x8x256xf32, #tpu.memory_space<vmem>>, vector<1x8x256xf32>
    %cst = arith.constant dense<0.000000e+00> : vector<1x8xf32>
    %1 = vector.multi_reduction <add>, %0, %cst [2] : vector<1x8x256xf32> to vector<1x8xf32>
    %cst_2 = arith.constant 3.906250e-03 : f32
    %2 = vector.broadcast %cst_2 : f32 to vector<1x8xf32>
    %3 = arith.mulf %1, %2 : vector<1x8xf32>
    %c0_3 = arith.constant 0 : index
    %c0_4 = arith.constant 0 : index
    %4 = vector.load %arg2[%c0_3, %c0_4] : memref<8x2xf32, #tpu.memory_space<vmem>>, vector<8x2xf32>
    %c0_5 = arith.constant 0 : index
    %c0_6 = arith.constant 0 : index
    %5 = vector.load %arg4[%c0_5, %c0_6] : memref<2x8xf32, #tpu.memory_space<vmem>>, vector<2x8xf32>
    %6 = vector.shape_cast %3 : vector<1x8xf32> to vector<1x8x1xf32>
    %7 = vector.shape_cast %4 : vector<8x2xf32> to vector<1x8x2xf32>
    %8 = vector.broadcast %6 : vector<1x8x1xf32> to vector<1x8x2xf32>
    %9 = arith.mulf %8, %7 : vector<1x8x2xf32>
    %cst_7 = arith.constant dense<0.000000e+00> : vector<1x2xf32>
    %10 = vector.multi_reduction <add>, %9, %cst_7 [1] : vector<1x8x2xf32> to vector<1x2xf32>
    %c0_8 = arith.constant 0 : index
    %c0_9 = arith.constant 0 : index
    %11 = vector.load %arg3[%c0_8, %c0_9] : memref<1x2xf32, #tpu.memory_space<vmem>>, vector<1x2xf32>
    %12 = arith.addf %10, %11 : vector<1x2xf32>
    %cst_10 = arith.constant 0.000000e+00 : f32
    %13 = vector.broadcast %cst_10 : f32 to vector<1x2xf32>
    %14 = arith.maximumf %12, %13 : vector<1x2xf32>
    %15 = vector.shape_cast %14 : vector<1x2xf32> to vector<1x2x1xf32>
    %16 = vector.shape_cast %5 : vector<2x8xf32> to vector<1x2x8xf32>
    %17 = vector.broadcast %15 : vector<1x2x1xf32> to vector<1x2x8xf32>
    %18 = arith.mulf %17, %16 : vector<1x2x8xf32>
    %cst_11 = arith.constant dense<0.000000e+00> : vector<1x8xf32>
    %19 = vector.multi_reduction <add>, %18, %cst_11 [1] : vector<1x2x8xf32> to vector<1x8xf32>
    %c0_12 = arith.constant 0 : index
    %c0_13 = arith.constant 0 : index
    %20 = vector.load %arg5[%c0_12, %c0_13] : memref<1x8xf32, #tpu.memory_space<vmem>>, vector<1x8xf32>
    %21 = arith.addf %19, %20 : vector<1x8xf32>
    %cst_14 = arith.constant 3.000000e+00 : f32
    %22 = vector.broadcast %cst_14 : f32 to vector<1x8xf32>
    %23 = arith.addf %21, %22 : vector<1x8xf32>
    %cst_15 = arith.constant 0.000000e+00 : f32
    %cst_16 = arith.constant 6.000000e+00 : f32
    %24 = vector.broadcast %cst_15 : f32 to vector<1x8xf32>
    %25 = arith.maximumf %24, %23 : vector<1x8xf32>
    %26 = vector.broadcast %cst_16 : f32 to vector<1x8xf32>
    %27 = arith.minimumf %26, %25 : vector<1x8xf32>
    %cst_17 = arith.constant 0.166666672 : f32
    %28 = vector.broadcast %cst_17 : f32 to vector<1x8xf32>
    %29 = arith.mulf %27, %28 : vector<1x8xf32>
    %30 = vector.shape_cast %29 : vector<1x8xf32> to vector<1x8x1xf32>
    %31 = vector.broadcast %30 : vector<1x8x1xf32> to vector<1x8x256xf32>
    %32 = arith.mulf %0, %31 : vector<1x8x256xf32>
    %c0_18 = arith.constant 0 : index
    %c0_19 = arith.constant 0 : index
    %c0_20 = arith.constant 0 : index
    %33 = vector.load %arg6[%c0_18, %c0_19, %c0_20] : memref<1x8x256xf32, #tpu.memory_space<vmem>>, vector<1x8x256xf32>
    tpu.vector_store %arg6[%c0_18, %c0_19, %c0_20], %32 {strides = array<i32>} : memref<1x8x256xf32, #tpu.memory_space<vmem>>, vector<1x8x256xf32>,
    return
  }
  func.func @transform_0(%arg0: i32) -> (i32, i32, i32) {
    %c0_i32 = arith.constant 0 : i32
    %c0_i32_0 = arith.constant 0 : i32
    %c0_i32_1 = arith.constant 0 : i32
    return %arg0, %c0_i32, %c0_i32_0 : i32, i32, i32
  }
  func.func @transform_1(%arg0: i32) -> (i32, i32) {
    %c0_i32 = arith.constant 0 : i32
    %c0_i32_0 = arith.constant 0 : i32
    %c0_i32_1 = arith.constant 0 : i32
    return %c0_i32, %c0_i32_0 : i32, i32
  }
  func.func @transform_2(%arg0: i32) -> (i32, i32) {
    %c0_i32 = arith.constant 0 : i32
    %c0_i32_0 = arith.constant 0 : i32
    %c0_i32_1 = arith.constant 0 : i32
    return %c0_i32, %c0_i32_0 : i32, i32
  }
  func.func @transform_3(%arg0: i32) -> (i32, i32) {
    %c0_i32 = arith.constant 0 : i32
    %c0_i32_0 = arith.constant 0 : i32
    %c0_i32_1 = arith.constant 0 : i32
    return %c0_i32, %c0_i32_0 : i32, i32
  }
  func.func @transform_4(%arg0: i32) -> (i32, i32) {
    %c0_i32 = arith.constant 0 : i32
    %c0_i32_0 = arith.constant 0 : i32
    %c0_i32_1 = arith.constant 0 : i32
    return %c0_i32, %c0_i32_0 : i32, i32
  }
  func.func @transform_5(%arg0: i32) -> (i32, i32, i32) {
    %c0_i32 = arith.constant 0 : i32
    %c0_i32_0 = arith.constant 0 : i32
    %c0_i32_1 = arith.constant 0 : i32
    return %arg0, %c0_i32, %c0_i32_0 : i32, i32, i32
  }
}

</mosaic_0001>

<llo_original>
// kernel: tpu_custom_call.1
$region0: #{tpu_custom_call.1}
  #allocation0 [shape = 'u32[]', space=smem, size = 0x4, offset = 0x4, fixed_abs, tag = 'smem constant byte address 0x4 - core index']
  #allocation1 [shape = 'u32[144,128]{1,0:T(1,128)}', space=vmem, size = 0x12000, scoped, tag = 'internal scratch']
  %s0 = inlined_call_operand.hbm [shape: f32[2,8,256], index: 0, kind: input, shape index: {}]
  %s1 = inlined_call_operand.vmem [shape: f32[8,2], index: 1, kind: input, shape index: {}]
  %s2 = inlined_call_operand.vmem [shape: f32[1,2], index: 2, kind: input, shape index: {}]
  %s3 = inlined_call_operand.vmem [shape: f32[2,8], index: 3, kind: input, shape index: {}]
  %s4 = inlined_call_operand.vmem [shape: f32[1,8], index: 4, kind: input, shape index: {}]
  %s5 = inlined_call_operand.hbm [shape: f32[2,8,256], index: 5, kind: output, shape index: {}]
  %s6 = sld [smem:[#allocation0]]
  $region57: #{tpu_custom_call.1} parent=0
    _
  %s8 = ssub.s32 1, %s6
  %s9 = scalar_select 0, %s8, %s6
  $region1: #{tpu_custom_call.1} parent=0
    #allocation2 [shape = 'u8[16384]{0}', space=vmem, size = 0x4000, scoped, tag = 'input window, operand 0']
    #allocation3 [shape = 's32[2]{0}', space=sflag, size = 0x8, scoped, tag = 'scoped memory for tpu_custom_call.1']
    #allocation4 [shape = 's32[2]{0}', space=sflag, size = 0x8, scoped, tag = 'scoped memory for tpu_custom_call.1']
    #allocation5 [shape = 'u8[16384]{0}', space=vmem, size = 0x4000, scoped, tag = 'output window, operand 0']
    %10 = vsyncpa [#allocation3], 0
    %s11 = scalar_lea.sflag [#allocation3], 1
    %12 = vsyncpa %s11, 0
    %13 = vsyncpa [#allocation4], 0
    %s14 = scalar_lea.sflag [#allocation4], 1
    %15 = vsyncpa %s14, 0
    loop: start=0, step=1, limit=4
    $region2: #{tpu_custom_call.1} parent=1 // loop_pre_header
      _
    $region3: #{tpu_custom_call.1} parent=1 // loop_header
      %s17 = sphi 0, %s21
      %p18 = scmp.ge.s32.totalorder %s17, 4
      %s27 = sphi 0, %s29
      %s30 = sphi 0, %s27
      %s31 = sphi 0, %s30
      %s47 = sphi 0, %s31
      %s51 = sphi 0, %s51
      %s53 = sphi 0, %s51
      %s54 = sphi 0, %s53
      %s68 = sphi 0, %s54
      %s72 = sphi 0, %s72
      %s74 = sphi 0, %s72
      %s75 = sphi 0, %s74
      %s89 = sphi 0, %s75
      %s93 = sphi 0, %s93
      %s95 = sphi 0, %s93
      %s96 = sphi 0, %s95
      %s110 = sphi 0, %s96
      %s114 = sphi 0, %s114
      %s116 = sphi 0, %s114
      %s117 = sphi 0, %s116
      %s131 = sphi 0, %s117
      %s137 = sphi 0, %s139
      %s140 = sphi 0, %s137
      %s141 = sphi 0, %s140
      %s157 = sphi 0, %s141
    $region4: #{tpu_custom_call.1} parent=1 // loop_header_branch
      %20 = sbr.rel (%p18) target = $region8
    $region5: #{tpu_custom_call.1} parent=1 // loop_body
      %s22 = ssub.s32 %s17, 1
      %s23 = ssub.s32 %s17, 2
      %s24 = sadd.s32 %s17, 1
      %s25 = ssub.s32 %s17, %s24
      %p26 = scmp.eq.s32.totalorder %s25, 0
      %s28 = sadd.s32 %s27, 1
      %s29 = scalar_select %p26, %s27, %s28
      %p32 = pneg %p26
      %p33 = scmp.eq.s32.totalorder %s17, 1
      %p34 = por %p32, %p33
      %p35 = scmp.ne.s32.totalorder %s27, %s30
      %p36 = scmp.eq.s32.totalorder %s17, 0
      %p37 = por %p35, %p36
      %p38 = scmp.ne.s32.totalorder %s27, %s30
      %p39 = scmp.eq.s32.totalorder %s22, 1
      %p40 = por %p38, %p39
      %p41 = scmp.ne.s32.totalorder %s30, %s31
      %p42 = scmp.eq.s32.totalorder %s22, 0
      %p43 = por %p41, %p42
      %p44 = scmp.ne.s32.totalorder %s30, %s31
      %p45 = scmp.eq.s32.totalorder %s23, 1
      %p46 = por %p44, %p45
      %p48 = scmp.ne.s32.totalorder %s31, %s47
      %p49 = scmp.eq.s32.totalorder %s23, 0
      %p50 = por %p48, %p49
      %s52 = sadd.s32 %s51, 1
      %p55 = scmp.eq.s32.totalorder %s17, 1
      %p56 = scmp.ne.s32.totalorder %s51, %s53
      %p57 = scmp.eq.s32.totalorder %s17, 0
      %p58 = por %p56, %p57
      %p59 = scmp.ne.s32.totalorder %s51, %s53
      %p60 = scmp.eq.s32.totalorder %s22, 1
      %p61 = por %p59, %p60
      %p62 = scmp.ne.s32.totalorder %s53, %s54
      %p63 = scmp.eq.s32.totalorder %s22, 0
      %p64 = por %p62, %p63
      %p65 = scmp.ne.s32.totalorder %s53, %s54
      %p66 = scmp.eq.s32.totalorder %s23, 1
      %p67 = por %p65, %p66
      %p69 = scmp.ne.s32.totalorder %s54, %s68
      %p70 = scmp.eq.s32.totalorder %s23, 0
      %p71 = por %p69, %p70
      %s73 = sadd.s32 %s72, 1
      %p76 = scmp.eq.s32.totalorder %s17, 1
      %p77 = scmp.ne.s32.totalorder %s72, %s74
      %p78 = scmp.eq.s32.totalorder %s17, 0
      %p79 = por %p77, %p78
      %p80 = scmp.ne.s32.totalorder %s72, %s74
      %p81 = scmp.eq.s32.totalorder %s22, 1
      %p82 = por %p80, %p81
      %p83 = scmp.ne.s32.totalorder %s74, %s75
      %p84 = scmp.eq.s32.totalorder %s22, 0
      %p85 = por %p83, %p84
      %p86 = scmp.ne.s32.totalorder %s74, %s75
      %p87 = scmp.eq.s32.totalorder %s23, 1
      %p88 = por %p86, %p87
      %p90 = scmp.ne.s32.totalorder %s75, %s89
      %p91 = scmp.eq.s32.totalorder %s23, 0
      %p92 = por %p90, %p91
      %s94 = sadd.s32 %s93, 1
      %p97 = scmp.eq.s32.totalorder %s17, 1
      %p98 = scmp.ne.s32.totalorder %s93, %s95
      %p99 = scmp.eq.s32.totalorder %s17, 0
      %p100 = por %p98, %p99
      %p101 = scmp.ne.s32.totalorder %s93, %s95
      %p102 = scmp.eq.s32.totalorder %s22, 1
      %p103 = por %p101, %p102
      %p104 = scmp.ne.s32.totalorder %s95, %s96
      %p105 = scmp.eq.s32.totalorder %s22, 0
      %p106 = por %p104, %p105
      %p107 = scmp.ne.s32.totalorder %s95, %s96
      %p108 = scmp.eq.s32.totalorder %s23, 1
      %p109 = por %p107, %p108
      %p111 = scmp.ne.s32.totalorder %s96, %s110
      %p112 = scmp.eq.s32.totalorder %s23, 0
      %p113 = por %p111, %p112
      %s115 = sadd.s32 %s114, 1
      %p118 = scmp.eq.s32.totalorder %s17, 1
      %p119 = scmp.ne.s32.totalorder %s114, %s116
      %p120 = scmp.eq.s32.totalorder %s17, 0
      %p121 = por %p119, %p120
      %p122 = scmp.ne.s32.totalorder %s114, %s116
      %p123 = scmp.eq.s32.totalorder %s22, 1
      %p124 = por %p122, %p123
      %p125 = scmp.ne.s32.totalorder %s116, %s117
      %p126 = scmp.eq.s32.totalorder %s22, 0
      %p127 = por %p125, %p126
      %p128 = scmp.ne.s32.totalorder %s116, %s117
      %p129 = scmp.eq.s32.totalorder %s23, 1
      %p130 = por %p128, %p129
      %p132 = scmp.ne.s32.totalorder %s117, %s131
      %p133 = scmp.eq.s32.totalorder %s23, 0
      %p134 = por %p132, %p133
      %s135 = ssub.s32 %s17, %s24
      %p136 = scmp.eq.s32.totalorder %s135, 0
      %s138 = sadd.s32 %s137, 1
      %s139 = scalar_select %p136, %s137, %s138
      %p142 = pneg %p136
      %p143 = scmp.eq.s32.totalorder %s17, 1
      %p144 = por %p142, %p143
      %p145 = scmp.ne.s32.totalorder %s137, %s140
      %p146 = scmp.eq.s32.totalorder %s17, 0
      %p147 = por %p145, %p146
      %p148 = scmp.ne.s32.totalorder %s137, %s140
      %p149 = scmp.eq.s32.totalorder %s22, 1
      %p150 = por %p148, %p149
      %p151 = scmp.ne.s32.totalorder %s140, %s141
      %p152 = scmp.eq.s32.totalorder %s22, 0
      %p153 = por %p151, %p152
      %p154 = scmp.ne.s32.totalorder %s140, %s141
      %p155 = scmp.eq.s32.totalorder %s23, 1
      %p156 = por %p154, %p155
      %p158 = scmp.ne.s32.totalorder %s141, %s157
      %p159 = scmp.eq.s32.totalorder %s23, 0
      %p160 = por %p158, %p159
      %p161 = scmp.le.s32.totalorder 1, %s17
      %p162 = scmp.lt.s32.totalorder %s17, 3
      %p163 = pnand %p161, %p162
      %p164 = pneg %p163
      // Predicated region
      $region9: #{tpu_custom_call.1} parent=5 // pred_check
        _
      $region10: #{tpu_custom_call.1} parent=5 // pred_check_branch
        %166 = sbr.rel (%p163) target = $region12
      $region11: #{tpu_custom_call.1} parent=5 // pred_region
        %s167 = ssub.s32 %s17, 1
        // Predicated region
        $region13: #{tpu_custom_call.1} parent=11 // pred_check
          %p168 = pneg %p64
        $region14: #{tpu_custom_call.1} parent=11 // pred_check_branch
          %170 = sbr.rel (%p168) target = $region16
        $region15: #{tpu_custom_call.1} parent=11 // pred_region
          _
        $region16: #{tpu_custom_call.1} parent=11 // pred_fallthru
          _
        // Predicated region
        $region17: #{tpu_custom_call.1} parent=11 // pred_check
          %p171 = pneg %p85
        $region18: #{tpu_custom_call.1} parent=11 // pred_check_branch
          %173 = sbr.rel (%p171) target = $region20
        $region19: #{tpu_custom_call.1} parent=11 // pred_region
          _
        $region20: #{tpu_custom_call.1} parent=11 // pred_fallthru
          _
        // Predicated region
        $region21: #{tpu_custom_call.1} parent=11 // pred_check
          %p174 = pneg %p106
        $region22: #{tpu_custom_call.1} parent=11 // pred_check_branch
          %176 = sbr.rel (%p174) target = $region24
        $region23: #{tpu_custom_call.1} parent=11 // pred_region
          _
        $region24: #{tpu_custom_call.1} parent=11 // pred_fallthru
          _
        // Predicated region
        $region25: #{tpu_custom_call.1} parent=11 // pred_check
          %p177 = pneg %p127
        $region26: #{tpu_custom_call.1} parent=11 // pred_check_branch
          %179 = sbr.rel (%p177) target = $region28
        $region27: #{tpu_custom_call.1} parent=11 // pred_region
          _
        $region28: #{tpu_custom_call.1} parent=11 // pred_fallthru
          _
      $region12: #{tpu_custom_call.1} parent=5 // pred_fallthru
        _
      %p180 = scmp.lt.s32.totalorder %s17, 2
      // Predicated region
      $region29: #{tpu_custom_call.1} parent=5 // pred_check
        %p181 = pneg %p180
      $region30: #{tpu_custom_call.1} parent=5 // pred_check_branch
        %183 = sbr.rel (%p181) target = $region32
      $region31: #{tpu_custom_call.1} parent=5 // pred_region
        // Predicated region
        $region33: #{tpu_custom_call.1} parent=31 // pred_check
          %p184 = pneg %p37
        $region34: #{tpu_custom_call.1} parent=31 // pred_check_branch
          %186 = sbr.rel (%p184) target = $region36
        $region35: #{tpu_custom_call.1} parent=31 // pred_region
          %s187 = sand.u32 %s27, 1
          %s188 = scalar_lea.sflag [#allocation3], %s187
          %s189 = sand.u32 %s27, 1
          %s190 = smul.addr %s189, 16
          %s191 = scalar_lea.vmem [#allocation2], %s190
          %s193 = ssub.s32 256, 256
          %194 = vsyncadd %s188, %s193
          %s195 = smul.addr %s17, 2
          %s196 = smul.addr %s195, 128
          %s197 = scalar_lea.hbm %s0, %s196
          %s199 = sshll.u32 %s191, 4
          %s200 = int_to_ptr.vmem [resolvable:$true] %s199
          %202 = dma.hbm_to_vmem [thread:$0]  %s197, 256, %s200, %s188
        $region36: #{tpu_custom_call.1} parent=31 // pred_fallthru
          _
      $region32: #{tpu_custom_call.1} parent=5 // pred_fallthru
        _
      %p203 = scmp.le.s32.totalorder 1, %s17
      %p204 = scmp.lt.s32.totalorder %s17, 3
      %p205 = pnand %p203, %p204
      %p206 = pneg %p205
      // Predicated region
      $region37: #{tpu_custom_call.1} parent=5 // pred_check
        _
      $region38: #{tpu_custom_call.1} parent=5 // pred_check_branch
        %208 = sbr.rel (%p205) target = $region40
      $region39: #{tpu_custom_call.1} parent=5 // pred_region
        %s209 = ssub.s32 %s17, 1
        %s210 = sand.u32 %s30, 1
        %s211 = scalar_lea.sflag [#allocation3], %s210
        %s212 = sand.u32 %s30, 1
        %s213 = smul.addr %s212, 16
        %s214 = scalar_lea.vmem [#allocation2], %s213
        // Predicated region
        $region41: #{tpu_custom_call.1} parent=39 // pred_check
          %p215 = pneg %p43
        $region42: #{tpu_custom_call.1} parent=39 // pred_check_branch
          %217 = sbr.rel (%p215) target = $region44
        $region43: #{tpu_custom_call.1} parent=39 // pred_region
          %218 = dma.done %s211, 256
        $region44: #{tpu_custom_call.1} parent=39 // pred_fallthru
          _
        %s219 = sand.u32 %s30, 1
        %s220 = scalar_lea.sflag [#allocation3], %s219
        %s221 = sand.u32 %s30, 1
        %s222 = smul.addr %s221, 16
        %s223 = scalar_lea.vmem [#allocation2], %s222
        %p224 = pneg %p43
        %p225 = pneg %p40
        %p226 = pneg %p64
        %p227 = pneg %p61
        %p228 = pneg %p85
        %p229 = pneg %p82
        %p230 = pneg %p106
        %p231 = pneg %p103
        %p232 = pneg %p127
        %p233 = pneg %p124
        %p234 = pneg %p153
        %p235 = pneg %p150
        %s236 = sand.u32 %s140, 1
        %s237 = scalar_lea.sflag [#allocation4], %s236
        %s238 = sand.u32 %s140, 1
        %s239 = smul.addr %s238, 16
        %s240 = scalar_lea.vmem [#allocation5], %s239
        %v241 = vld [vmem:[%s214] sm:$0xff]
        %v242 = vld [vmem:[%s214 + $0x8] sm:$0xff]
        %v243 = vadd.f32 %v241, %v242
        %244 = vadd.xlane.f32.xlu0 %v243
        %v245 = vpop.xlane.xlu0 %244
        %v246 = vmul.f32 %v245, 0.00390625
        %v247 = vld [vmem:[%s1] sm:$0xff]
        %v248 = vld [vmem:[%s3] sm:$0x3]
        %v249 = vmul.f32 %v246, %v247
        %vm250 = vcmask 15360
        %v251 = vsel %vm250, %v249, 0.0
        %v252 = vrot.slane %v251, 4
        %v253 = vadd.f32 %v251, %v252
        %v254 = vrot.slane %v253, 2
        %v255 = vadd.f32 %v253, %v254
        %v256 = vrot.slane %v255, 1
        %v257 = vadd.f32 %v255, %v256
        %v258 = vld [vmem:[%s2] sm:$0x1]
        %v259 = vadd.f32 %v257, %v258
        %v260 = vmax.f32 %v259, 0.0
        %v261 = vlaneseq
        %v262 = vshrl.u32 %v261, 7
        %v263 = vsub.s32 0, %v262
        %v264 = vrot.slane %v260, %v263
        %266 = vbcast.lane.b32.xlu0 %v264, 256
        %v267 = vpop.permute.xlu0 %266
        %v268 = vmul.f32 %v267, %v248
        %vm269 = vcmask 58368
        %v270 = vsel %vm269, %v268, 0.0
        %v271 = vrot.slane %v270, 4
        %v272 = vadd.f32 %v270, %v271
        %v273 = vrot.slane %v272, 2
        %v274 = vadd.f32 %v272, %v273
        %v275 = vrot.slane %v274, 1
        %v276 = vadd.f32 %v274, %v275
        %v277 = vld [vmem:[%s4] sm:$0x1]
        %v278 = vadd.f32 %v276, %v277
        %v279 = vadd.f32 %v278, 3.0
        %v280 = vmax.f32 %v279, 0.0
        %v281 = vmin.f32 %v280, 6.0
        %v282 = vmul.f32 %v281, 0.16666667
        %v283 = vlaneseq
        %v284 = vshrl.u32 %v283, 7
        %v285 = vsub.s32 0, %v284
        %v286 = vrot.slane %v282, %v285
        %288 = vbcast.lane.b32.xlu0 %v286, 256
        %v289 = vpop.permute.xlu0 %288
        %v290 = vmul.f32 %v241, %v289
        %v291 = vmul.f32 %v242, %v289
        %292 = vst [vmem:[%s240] sm:$0xff] %v290
        %293 = vst [vmem:[%s240 + $0x8] sm:$0xff] %v291
        %s294 = sand.u32 %s140, 1
        %s295 = scalar_lea.sflag [#allocation4], %s294
        %s296 = sand.u32 %s140, 1
        %s297 = smul.addr %s296, 16
        %s298 = scalar_lea.vmem [#allocation5], %s297
        // Predicated region
        $region45: #{tpu_custom_call.1} parent=39 // pred_check
          %p299 = pneg %p150
        $region46: #{tpu_custom_call.1} parent=39 // pred_check_branch
          %301 = sbr.rel (%p299) target = $region48
        $region47: #{tpu_custom_call.1} parent=39 // pred_region
          %s303 = ssub.s32 256, 256
          %304 = vsyncadd %s295, %s303
          %s305 = smul.addr %s22, 2
          %s306 = smul.addr %s305, 128
          %s307 = scalar_lea.hbm %s5, %s306
          %s309 = sshll.u32 %s298, 4
          %s310 = int_to_ptr.vmem [resolvable:$true] %s309
          %312 = dma.vmem_to_hbm [thread:$0]  %s310, 256, %s307, %s295
        $region48: #{tpu_custom_call.1} parent=39 // pred_fallthru
          _
      $region40: #{tpu_custom_call.1} parent=5 // pred_fallthru
        _
      %p313 = scmp.le.s32.totalorder 2, %s17
      // Predicated region
      $region49: #{tpu_custom_call.1} parent=5 // pred_check
        %p314 = pneg %p313
      $region50: #{tpu_custom_call.1} parent=5 // pred_check_branch
        %316 = sbr.rel (%p314) target = $region52
      $region51: #{tpu_custom_call.1} parent=5 // pred_region
        %s317 = ssub.s32 %s17, 2
        // Predicated region
        $region53: #{tpu_custom_call.1} parent=51 // pred_check
          %p318 = pneg %p156
        $region54: #{tpu_custom_call.1} parent=51 // pred_check_branch
          %320 = sbr.rel (%p318) target = $region56
        $region55: #{tpu_custom_call.1} parent=51 // pred_region
          %s321 = sand.u32 %s141, 1
          %s322 = scalar_lea.sflag [#allocation4], %s321
          %s323 = sand.u32 %s141, 1
          %s324 = smul.addr %s323, 16
          %s325 = scalar_lea.vmem [#allocation5], %s324
          %326 = dma.done %s322, 256
        $region56: #{tpu_custom_call.1} parent=51 // pred_fallthru
          _
      $region52: #{tpu_custom_call.1} parent=5 // pred_fallthru
        _
    $region6: #{tpu_custom_call.1} parent=1 // loop_footer
      %s21 = sadd.s32 1, %s17
    $region7: #{tpu_custom_call.1} parent=1 // loop_footer_branch
      %16 = sbr.rel target = $region3
    $region8: #{tpu_custom_call.1} parent=1 // loop_exit
      _
    %327 = vsyncpa [#allocation3], 1
    %s328 = scalar_lea.sflag [#allocation3], 1
    %329 = vsyncpa %s328, 1
    %330 = vsyncpa [#allocation4], 1
    %s331 = scalar_lea.sflag [#allocation4], 1
    %332 = vsyncpa %s331, 1

</llo_original>
